<compile_context>
chip_gen: v6e
topology: v6e:2x2x1
jax: 0.10.0
libtpu: 0.0.40
codegen_flags: <defaults>
</compile_context>

<pallas_src>
import jax
import jax.numpy as jnp
from jax.experimental import pallas as pl
from jax.experimental.pallas import tpu as pltpu

HIDDEN = 256


def _round_up(x, m):
    return ((x + m - 1) // m) * m


def _row_align(dtype):
    # sublane granule for the activation dtype (8 for f32, 16 for bf16, ...)
    return max(8, 32 // jnp.dtype(dtype).itemsize)


def make_critic_kernel(matmul_dtype):
    """Whole MLP hot path in one kernel; weights stay VMEM-resident across grid steps."""

    def kernel(x_ref, w1_ref, w2_ref, w3_ref, pack_ref, out_ref, z_ref):
        # packed small operands (one DMA): rows 0..2 = b1,b2,b3 ;
        # row 3 = output-weight row ; row 4 = output bias (broadcast).
        b1 = pack_ref[0:1, :]            # (1, H)
        b2 = pack_ref[1:2, :]
        b3 = pack_ref[2:3, :]
        wo = pack_ref[3:4, :]            # (1, H) output Linear weight as a row
        bo = pack_ref[4:5, 0:1]          # (1, 1) output Linear bias

        def mm(x, w):
            # operands already in matmul_dtype; accumulate in f32 on the MXU
            return jnp.dot(x, w, preferred_element_type=jnp.float32)

        # layer 1: x is the pre-packed [s | a] tile, already matmul_dtype
        h1 = jnp.maximum(mm(x_ref[...], w1_ref[...]) + b1, 0.0)
        # layer 2 (cast only the activation at the MXU input)
        h2 = jnp.maximum(mm(h1.astype(matmul_dtype), w2_ref[...]) + b2, 0.0)
        # layer 3 (pre-activation features == self.z)
        z = mm(h2.astype(matmul_dtype), w3_ref[...]) + b3
        z_ref[...] = z.astype(z_ref.dtype)
        # output Linear(256,1) on ReLU(z): VPU multiply + lane reduce
        h3 = jnp.maximum(z, 0.0)
        out_ref[...] = jnp.sum(h3 * wo, axis=-1, keepdims=True) + bo

    return kernel


def prepare_params(params, matmul_dtype=jnp.bfloat16):
    """One-time parameter repacking / pre-casting (outside the per-call hot path)."""
    w1, b1, w2, b2, w3, b3, wo, bo = params
    H = w1.shape[1]
    pack = jnp.zeros((8, H), jnp.float32)
    pack = pack.at[0].set(jnp.asarray(b1, jnp.float32).reshape(H))
    pack = pack.at[1].set(jnp.asarray(b2, jnp.float32).reshape(H))
    pack = pack.at[2].set(jnp.asarray(b3, jnp.float32).reshape(H))
    pack = pack.at[3].set(jnp.asarray(wo, jnp.float32).reshape(H))   # output weight row
    pack = pack.at[4, :].set(jnp.asarray(bo, jnp.float32).reshape(()))
    return (jnp.asarray(w1, matmul_dtype),     # (in, H), pre-cast: no per-step VPU casts
            jnp.asarray(w2, matmul_dtype),
            jnp.asarray(w3, matmul_dtype),
            pack,                              # small f32 operands stay f32 (VPU work)
            jnp.dtype(matmul_dtype))


def critic_forward(s, a, prepared, *, block_b=1024, split_for_megacore=True,
                   z_dtype=jnp.float32):
    w1, w2, w3, pack, md = prepared
    B = s.shape[0]
    assert a.shape[0] == B
    in_dim = w1.shape[0]
    assert s.shape[1] + a.shape[1] == in_dim
    H = w2.shape[1]

    # Pack [s | a] once per call, directly in the matmul dtype.  This is a tiny
    # XLA copy (B x in_dim) compared with the kernel's z writeback, and it lets
    # layer 1 run as a single MXU push with one input DMA stream.
    x = jnp.concatenate([s.astype(md), a.astype(md)], axis=1)

    # --- batch tile selection -------------------------------------------------
    ra = _row_align(md)
    block_b = max(ra, _round_up(block_b, ra))
    TB = B if B <= block_b else block_b
    # v7x megacore: ensure >= 2 grid steps for non-tiny batches so the
    # "parallel" batch axis shards across both TensorCores.  On v5e/v6e this
    # only costs one extra ~0.35 us step.
    if split_for_megacore and B >= 2 * ra:
        TB = min(TB, _round_up((B + 1) // 2, ra))

    pad = (-B) % TB
    if pad:
        x = jnp.pad(x, ((0, pad), (0, 0)))     # zero rows -> finite garbage, sliced off
    Bp = B + pad
    grid = (Bp // TB,)

    act_spec = pl.BlockSpec((TB, in_dim), lambda i: (i, 0))
    # constant index_map -> weights fetched once, stay VMEM-resident across steps
    w_spec = lambda shp: pl.BlockSpec(shp, lambda i: (0, 0))

    # Explicit VMEM budget so large tiles don't trip v5e's 16 MiB scoped default.
    itemsize = jnp.dtype(md).itemsize
    est = (2 * (w1.size + w2.size + w3.size) * itemsize      # double-buffered weights
           + 2 * pack.size * 4
           + 2 * TB * in_dim * itemsize                      # x double buffer
           + 2 * TB * (H + 1) * 4                            # z / out double buffers
           + 6 * TB * H * 4                                  # h1/h2/z/h3 temporaries
           + (4 << 20))
    vmem_limit = int(min(64 << 20, max(32 << 20, est)))

    out, z = pl.pallas_call(
        make_critic_kernel(md),
        out_shape=(
            jax.ShapeDtypeStruct((Bp, 1), jnp.float32),      # critic value
            jax.ShapeDtypeStruct((Bp, H), z_dtype),          # z (pre-activation)
        ),
        grid=grid,
        in_specs=[
            act_spec,
            w_spec(w1.shape), w_spec(w2.shape), w_spec(w3.shape),
            w_spec(pack.shape),
        ],
        out_specs=(
            pl.BlockSpec((TB, 1), lambda i: (i, 0)),
            pl.BlockSpec((TB, H), lambda i: (i, 0)),
        ),
        compiler_params=pltpu.CompilerParams(
            dimension_semantics=("parallel",),               # megacore-shard batch
            vmem_limit_bytes=vmem_limit,
        ),
    )(x, w1, w2, w3, pack)

    if pad:
        out = out[:B]
        z = z[:B]
    return out, z


def init_params(key, input_size, hidden_size=HIDDEN, output_size=1):
    ks = jax.random.split(key, 8)
    scale = 0.05
    w1 = scale * jax.random.normal(ks[0], (input_size, hidden_size), jnp.float32)
    b1 = scale * jax.random.normal(ks[1], (1, hidden_size), jnp.float32)
    w2 = scale * jax.random.normal(ks[2], (hidden_size, hidden_size), jnp.float32)
    b2 = scale * jax.random.normal(ks[3], (1, hidden_size), jnp.float32)
    w3 = scale * jax.random.normal(ks[4], (hidden_size, hidden_size), jnp.float32)
    b3 = scale * jax.random.normal(ks[5], (1, hidden_size), jnp.float32)
    wo = scale * jax.random.normal(ks[6], (hidden_size, output_size), jnp.float32)
    bo = scale * jax.random.normal(ks[7], (1, output_size), jnp.float32)
    return (w1, b1, w2, b2, w3, b3, wo, bo)


def reference_forward(s, a, params):
    """Pure-JAX reference mirroring the PyTorch module (f32 everywhere)."""
    w1, b1, w2, b2, w3, b3, wo, bo = params
    x = jnp.concatenate([s, a], axis=1)
    h1 = jnp.maximum(x @ w1 + b1, 0.0)
    h2 = jnp.maximum(h1 @ w2 + b2, 0.0)
    z = h2 @ w3 + b3
    out = jnp.maximum(z, 0.0) @ wo + bo
    return out, z


if __name__ == "__main__":
    key = jax.random.PRNGKey(0)
    k_s, k_a, k_p, k_s2, k_a2 = jax.random.split(key, 5)

    observation_space = 24        # obs feature count
    action_dim = 4                # action_space.shape[0]
    input_size = observation_space + action_dim

    params = init_params(k_p, input_size)
    prepared_bf16 = prepare_params(params)                       # default: bf16 MXU path
    prepared_f32 = prepare_params(params, matmul_dtype=jnp.float32)

    # --- small, single-step case (grid=(1,)) -------------------------------
    batch = 8
    s = jax.random.normal(k_s, (batch, observation_space), jnp.float32)
    a = jax.random.normal(k_a, (batch, action_dim), jnp.float32)
    ref_out, ref_z = reference_forward(s, a, params)

    out_f32, z_f32 = jax.block_until_ready(critic_forward(s, a, prepared_f32))
    assert out_f32.shape == (batch, 1) and z_f32.shape == (batch, HIDDEN)
    assert jnp.allclose(out_f32, ref_out, atol=1e-4, rtol=1e-4)
    assert jnp.allclose(z_f32, ref_z, atol=1e-4, rtol=1e-4)

    out_bf, z_bf = jax.block_until_ready(critic_forward(s, a, prepared_bf16))
    assert jnp.allclose(out_bf, ref_out, atol=5e-2, rtol=5e-2)
    assert jnp.allclose(z_bf, ref_z, atol=5e-2, rtol=5e-2)

    # --- batch-tiled case (grid > 1, with batch padding), small tile --------
    batch2 = 40
    s2 = jax.random.normal(k_s2, (batch2, observation_space), jnp.float32)
    a2 = jax.random.normal(k_a2, (batch2, action_dim), jnp.float32)
    ref_out2, ref_z2 = reference_forward(s2, a2, params)

    out2, z2 = jax.block_until_ready(
        critic_forward(s2, a2, prepared_f32, block_b=16))
    assert out2.shape == (batch2, 1) and z2.shape == (batch2, HIDDEN)
    assert jnp.allclose(out2, ref_out2, atol=1e-4, rtol=1e-4)
    assert jnp.allclose(z2, ref_z2, atol=1e-4, rtol=1e-4)

    # --- default config (bf16, megacore split -> grid=2 with padding) -------
    out3, z3 = jax.block_until_ready(critic_forward(s2, a2, prepared_bf16))
    assert out3.shape == (batch2, 1) and z3.shape == (batch2, HIDDEN)
    assert jnp.allclose(out3, ref_out2, atol=5e-2, rtol=5e-2)
    assert jnp.allclose(z3, ref_z2, atol=5e-2, rtol=5e-2)

    print("KERNEL_OK")
</pallas_src>

<mosaic_0001>
module attributes {stable_mosaic.version = 11 : i64} {
  func.func @kernel(%arg0: i32, %arg1: memref<8x28xf32, #tpu.memory_space<vmem>>, %arg2: memref<28x256xf32, #tpu.memory_space<vmem>>, %arg3: memref<256x256xf32, #tpu.memory_space<vmem>>, %arg4: memref<256x256xf32, #tpu.memory_space<vmem>>, %arg5: memref<8x256xf32, #tpu.memory_space<vmem>>, %arg6: memref<8x1xf32, #tpu.memory_space<vmem>>, %arg7: memref<8x256xf32, #tpu.memory_space<vmem>>) attributes {dimension_semantics = [#tpu.dimension_semantics<parallel>], iteration_bounds = array<i64: 1>, scalar_prefetch = 0 : i64, scratch_operands = 0 : i64, tpu.core_type = #tpu.core_type<tc>, window_params = [{transform_indices = @transform_0, window_bounds = array<i64: 8, 28>}, {pipeline_mode = #tpu.pipeline_mode<synchronous>, transform_indices = @transform_1, window_bounds = array<i64: 28, 256>}, {pipeline_mode = #tpu.pipeline_mode<synchronous>, transform_indices = @transform_2, window_bounds = array<i64: 256, 256>}, {pipeline_mode = #tpu.pipeline_mode<synchronous>, transform_indices = @transform_3, window_bounds = array<i64: 256, 256>}, {pipeline_mode = #tpu.pipeline_mode<synchronous>, transform_indices = @transform_4, window_bounds = array<i64: 8, 256>}, {transform_indices = @transform_5, window_bounds = array<i64: 8, 1>}, {transform_indices = @transform_6, window_bounds = array<i64: 8, 256>}]} {
    %c0 = arith.constant 0 : index
    %c0_0 = arith.constant 0 : index
    %0 = vector.load %arg5[%c0, %c0_0] : memref<8x256xf32, #tpu.memory_space<vmem>>, vector<1x256xf32>
    %c1 = arith.constant 1 : index
    %c0_1 = arith.constant 0 : index
    %1 = vector.load %arg5[%c1, %c0_1] : memref<8x256xf32, #tpu.memory_space<vmem>>, vector<1x256xf32>
    %c2 = arith.constant 2 : index
    %c0_2 = arith.constant 0 : index
    %2 = vector.load %arg5[%c2, %c0_2] : memref<8x256xf32, #tpu.memory_space<vmem>>, vector<1x256xf32>
    %c3 = arith.constant 3 : index
    %c0_3 = arith.constant 0 : index
    %3 = vector.load %arg5[%c3, %c0_3] : memref<8x256xf32, #tpu.memory_space<vmem>>, vector<1x256xf32>
    %c4 = arith.constant 4 : index
    %c0_4 = arith.constant 0 : index
    %4 = vector.load %arg5[%c4, %c0_4] : memref<8x256xf32, #tpu.memory_space<vmem>>, vector<1x1xf32>
    %c0_5 = arith.constant 0 : index
    %c0_6 = arith.constant 0 : index
    %5 = vector.load %arg1[%c0_5, %c0_6] : memref<8x28xf32, #tpu.memory_space<vmem>>, vector<8x28xf32>
    %c0_7 = arith.constant 0 : index
    %c0_8 = arith.constant 0 : index
    %6 = vector.load %arg2[%c0_7, %c0_8] : memref<28x256xf32, #tpu.memory_space<vmem>>, vector<28x256xf32>
    %cst = arith.constant dense<0.000000e+00> : vector<8x256xf32>
    %7 = tpu.matmul %5, %6, %cst {dimension_numbers = #tpu.dot_dimension_numbers<[1], [0], [0], [1], [0, 0, 1, 1], [], []>} : vector<8x28xf32>, vector<28x256xf32>, vector<8x256xf32> -> vector<8x256xf32>
    %8 = vector.broadcast %0 : vector<1x256xf32> to vector<8x256xf32>
    %9 = arith.addf %7, %8 : vector<8x256xf32>
    %cst_9 = arith.constant 0.000000e+00 : f32
    %10 = vector.broadcast %cst_9 : f32 to vector<8x256xf32>
    %11 = arith.maximumf %9, %10 : vector<8x256xf32>
    %c0_10 = arith.constant 0 : index
    %c0_11 = arith.constant 0 : index
    %12 = vector.load %arg3[%c0_10, %c0_11] : memref<256x256xf32, #tpu.memory_space<vmem>>, vector<256x256xf32>
    %cst_12 = arith.constant dense<0.000000e+00> : vector<8x256xf32>
    %13 = tpu.matmul %11, %12, %cst_12 {dimension_numbers = #tpu.dot_dimension_numbers<[1], [0], [0], [1], [0, 0, 1, 1], [], []>} : vector<8x256xf32>, vector<256x256xf32>, vector<8x256xf32> -> vector<8x256xf32>
    %14 = vector.broadcast %1 : vector<1x256xf32> to vector<8x256xf32>
    %15 = arith.addf %13, %14 : vector<8x256xf32>
    %cst_13 = arith.constant 0.000000e+00 : f32
    %16 = vector.broadcast %cst_13 : f32 to vector<8x256xf32>
    %17 = arith.maximumf %15, %16 : vector<8x256xf32>
    %c0_14 = arith.constant 0 : index
    %c0_15 = arith.constant 0 : index
    %18 = vector.load %arg4[%c0_14, %c0_15] : memref<256x256xf32, #tpu.memory_space<vmem>>, vector<256x256xf32>
    %cst_16 = arith.constant dense<0.000000e+00> : vector<8x256xf32>
    %19 = tpu.matmul %17, %18, %cst_16 {dimension_numbers = #tpu.dot_dimension_numbers<[1], [0], [0], [1], [0, 0, 1, 1], [], []>} : vector<8x256xf32>, vector<256x256xf32>, vector<8x256xf32> -> vector<8x256xf32>
    %20 = vector.broadcast %2 : vector<1x256xf32> to vector<8x256xf32>
    %21 = arith.addf %19, %20 : vector<8x256xf32>
    %c0_17 = arith.constant 0 : index
    %c0_18 = arith.constant 0 : index
    %22 = vector.load %arg7[%c0_17, %c0_18] : memref<8x256xf32, #tpu.memory_space<vmem>>, vector<8x256xf32>
    tpu.vector_store %arg7[%c0_17, %c0_18], %21 {strides = array<i32>} : memref<8x256xf32, #tpu.memory_space<vmem>>, vector<8x256xf32>,
    %cst_19 = arith.constant 0.000000e+00 : f32
    %23 = vector.broadcast %cst_19 : f32 to vector<8x256xf32>
    %24 = arith.maximumf %21, %23 : vector<8x256xf32>
    %25 = vector.broadcast %3 : vector<1x256xf32> to vector<8x256xf32>
    %26 = arith.mulf %24, %25 : vector<8x256xf32>
    %cst_20 = arith.constant dense<0.000000e+00> : vector<8xf32>
    %27 = vector.multi_reduction <add>, %26, %cst_20 [1] : vector<8x256xf32> to vector<8xf32>
    %28 = vector.shape_cast %27 : vector<8xf32> to vector<8x1xf32>
    %29 = vector.broadcast %4 : vector<1x1xf32> to vector<8x1xf32>
    %30 = arith.addf %28, %29 : vector<8x1xf32>
    %c0_21 = arith.constant 0 : index
    %c0_22 = arith.constant 0 : index
    %31 = vector.load %arg6[%c0_21, %c0_22] : memref<8x1xf32, #tpu.memory_space<vmem>>, vector<8x1xf32>
    tpu.vector_store %arg6[%c0_21, %c0_22], %30 {strides = array<i32>} : memref<8x1xf32, #tpu.memory_space<vmem>>, vector<8x1xf32>,
    return
  }
  func.func @transform_0(%arg0: i32) -> (i32, i32) {
    %c0_i32 = arith.constant 0 : i32
    %c0_i32_0 = arith.constant 0 : i32
    return %arg0, %c0_i32 : i32, i32
  }
  func.func @transform_1(%arg0: i32) -> (i32, i32) {
    %c0_i32 = arith.constant 0 : i32
    %c0_i32_0 = arith.constant 0 : i32
    %c0_i32_1 = arith.constant 0 : i32
    return %c0_i32, %c0_i32_0 : i32, i32
  }
  func.func @transform_2(%arg0: i32) -> (i32, i32) {
    %c0_i32 = arith.constant 0 : i32
    %c0_i32_0 = arith.constant 0 : i32
    %c0_i32_1 = arith.constant 0 : i32
    return %c0_i32, %c0_i32_0 : i32, i32
  }
  func.func @transform_3(%arg0: i32) -> (i32, i32) {
    %c0_i32 = arith.constant 0 : i32
    %c0_i32_0 = arith.constant 0 : i32
    %c0_i32_1 = arith.constant 0 : i32
    return %c0_i32, %c0_i32_0 : i32, i32
  }
  func.func @transform_4(%arg0: i32) -> (i32, i32) {
    %c0_i32 = arith.constant 0 : i32
    %c0_i32_0 = arith.constant 0 : i32
    %c0_i32_1 = arith.constant 0 : i32
    return %c0_i32, %c0_i32_0 : i32, i32
  }
  func.func @transform_5(%arg0: i32) -> (i32, i32) {
    %c0_i32 = arith.constant 0 : i32
    %c0_i32_0 = arith.constant 0 : i32
    return %arg0, %c0_i32 : i32, i32
  }
  func.func @transform_6(%arg0: i32) -> (i32, i32) {
    %c0_i32 = arith.constant 0 : i32
    %c0_i32_0 = arith.constant 0 : i32
    return %arg0, %c0_i32 : i32, i32
  }
}

</mosaic_0001>

<llo_original>
// kernel: tpu_custom_call.1
$region0: #{tpu_custom_call.1}
  #allocation0 [shape = 'u32[]', space=smem, size = 0x4, offset = 0x4, fixed_abs, tag = 'smem constant byte address 0x4 - core index']
  #allocation1 [shape = 'u32[144,128]{1,0:T(1,128)}', space=vmem, size = 0x12000, scoped, tag = 'internal scratch']
  %s0 = inlined_call_operand.hbm [shape: f32[8,28], index: 0, kind: input, shape index: {}]
  %s1 = inlined_call_operand.hbm [shape: f32[28,256], index: 1, kind: input, shape index: {}]
  %s2 = inlined_call_operand.hbm [shape: f32[256,256], index: 2, kind: input, shape index: {}]
  %s3 = inlined_call_operand.hbm [shape: f32[256,256], index: 3, kind: input, shape index: {}]
  %s4 = inlined_call_operand.hbm [shape: f32[8,256], index: 4, kind: input, shape index: {}]
  %s5 = inlined_call_operand.vmem [shape: f32[8,1], index: 5, kind: output, shape index: {0}]
  %s6 = inlined_call_operand.hbm [shape: f32[8,256], index: 6, kind: output, shape index: {1}]
  %7 = xla_tuple %s5, %s6
  %s8 = sld [smem:[#allocation0]]
  $region58: #{tpu_custom_call.1} parent=0
    _
  %s10 = ssub.s32 1, %s8
  %s11 = scalar_select 0, %s10, %s8
  $region1: #{tpu_custom_call.1} parent=0
    #allocation2 [shape = 'u8[4096]{0}', space=vmem, size = 0x1000, scoped, tag = 'input window, operand 0, single buffered']
    #allocation3 [shape = 's32[1]{0}', space=sflag, size = 0x4, scoped, tag = 'scoped memory for tpu_custom_call.1']
    #allocation4 [shape = 's32[1]{0}', space=sflag, size = 0x4, scoped, tag = 'scoped memory for tpu_custom_call.1']
    #allocation5 [shape = 'u8[32768]{0}', space=vmem, size = 0x8000, scoped, tag = 'input window, operand 1, single buffered']
    #allocation6 [shape = 's32[1]{0}', space=sflag, size = 0x4, scoped, tag = 'scoped memory for tpu_custom_call.1']
    #allocation7 [shape = 'u8[262144]{0}', space=vmem, size = 0x40000, scoped, tag = 'input window, operand 2, single buffered']
    #allocation8 [shape = 'u8[262144]{0}', space=vmem, size = 0x40000, scoped, tag = 'input window, operand 3, single buffered']
    #allocation9 [shape = 's32[1]{0}', space=sflag, size = 0x4, scoped, tag = 'scoped memory for tpu_custom_call.1']
    #allocation10 [shape = 'u8[8192]{0}', space=vmem, size = 0x2000, scoped, tag = 'input window, operand 4, single buffered']
    #allocation11 [shape = 'u8[8192]{0}', space=vmem, size = 0x2000, scoped, tag = 'output window, operand 1, single buffered']
    %12 = vsyncpa [#allocation3], 0
    %13 = vsyncpa [#allocation6], 0
    %14 = vsyncpa [#allocation9], 0
    %15 = vsyncpa [#allocation4], 0
    // Predicated region
    $region2: #{tpu_custom_call.1} parent=1 // pred_check
      _
    $region3: #{tpu_custom_call.1} parent=1 // pred_check_branch
      %17 = sbr.rel (0) target = $region5
    $region4: #{tpu_custom_call.1} parent=1 // pred_region
      %s19 = ssub.s32 128, 128
      %20 = vsyncadd [#allocation3], %s19
      %s22 = sshll.u32 [#allocation2], 4
      %s23 = int_to_ptr.vmem [resolvable:$true] %s22
      %25 = dma.hbm_to_vmem [thread:$0]  %s0, 128, %s23, [#allocation3]
    $region5: #{tpu_custom_call.1} parent=1 // pred_fallthru
      _
    // Predicated region
    $region6: #{tpu_custom_call.1} parent=1 // pred_check
      _
    $region7: #{tpu_custom_call.1} parent=1 // pred_check_branch
      %27 = sbr.rel (0) target = $region9
    $region8: #{tpu_custom_call.1} parent=1 // pred_region
      %s29 = ssub.s32 1024, 1024
      %30 = vsyncadd [#allocation6], %s29
      %s31 = sshll.u32 [#allocation5], 4
      %s32 = int_to_ptr.vmem [resolvable:$true] %s31
      %37 = dma.hbm_to_vmem [thread:$0]  %s1, 1024, %s32, [#allocation6], 256, 256, 16
    $region9: #{tpu_custom_call.1} parent=1 // pred_fallthru
      _
    // Predicated region
    $region10: #{tpu_custom_call.1} parent=1 // pred_check
      _
    $region11: #{tpu_custom_call.1} parent=1 // pred_check_branch
      %39 = sbr.rel (0) target = $region13
    $region12: #{tpu_custom_call.1} parent=1 // pred_region
      %s41 = ssub.s32 8192, 8192
      %42 = vsyncadd [#allocation6], %s41
      %s43 = sshll.u32 [#allocation7], 4
      %s44 = int_to_ptr.vmem [resolvable:$true] %s43
      %49 = dma.hbm_to_vmem [thread:$0]  %s2, 8192, %s44, [#allocation6], 256, 256, 16
    $region13: #{tpu_custom_call.1} parent=1 // pred_fallthru
      _
    // Predicated region
    $region14: #{tpu_custom_call.1} parent=1 // pred_check
      _
    $region15: #{tpu_custom_call.1} parent=1 // pred_check_branch
      %51 = sbr.rel (0) target = $region17
    $region16: #{tpu_custom_call.1} parent=1 // pred_region
      %s53 = ssub.s32 8192, 8192
      %54 = vsyncadd [#allocation9], %s53
      %s55 = sshll.u32 [#allocation8], 4
      %s56 = int_to_ptr.vmem [resolvable:$true] %s55
      %61 = dma.hbm_to_vmem [thread:$0]  %s3, 8192, %s56, [#allocation9], 256, 256, 16
    $region17: #{tpu_custom_call.1} parent=1 // pred_fallthru
      _
    // Predicated region
    $region18: #{tpu_custom_call.1} parent=1 // pred_check
      _
    $region19: #{tpu_custom_call.1} parent=1 // pred_check_branch
      %63 = sbr.rel (0) target = $region21
    $region20: #{tpu_custom_call.1} parent=1 // pred_region
      %s65 = ssub.s32 256, 256
      %66 = vsyncadd [#allocation9], %s65
      %s68 = sshll.u32 [#allocation10], 4
      %s69 = int_to_ptr.vmem [resolvable:$true] %s68
      %71 = dma.hbm_to_vmem [thread:$0]  %s4, 256, %s69, [#allocation9]
    $region21: #{tpu_custom_call.1} parent=1 // pred_fallthru
      _
    // Predicated region
    $region22: #{tpu_custom_call.1} parent=1 // pred_check
      _
    $region23: #{tpu_custom_call.1} parent=1 // pred_check_branch
      %73 = sbr.rel (0) target = $region25
    $region24: #{tpu_custom_call.1} parent=1 // pred_region
      %74 = dma.done [#allocation3], 128
    $region25: #{tpu_custom_call.1} parent=1 // pred_fallthru
      _
    // Predicated region
    $region26: #{tpu_custom_call.1} parent=1 // pred_check
      _
    $region27: #{tpu_custom_call.1} parent=1 // pred_check_branch
      %76 = sbr.rel (0) target = $region29
    $region28: #{tpu_custom_call.1} parent=1 // pred_region
      %77 = dma.done [#allocation6], 1024
    $region29: #{tpu_custom_call.1} parent=1 // pred_fallthru
      _
    // Predicated region
    $region30: #{tpu_custom_call.1} parent=1 // pred_check
      _
    $region31: #{tpu_custom_call.1} parent=1 // pred_check_branch
      %79 = sbr.rel (0) target = $region33
    $region32: #{tpu_custom_call.1} parent=1 // pred_region
      %80 = dma.done [#allocation6], 8192
    $region33: #{tpu_custom_call.1} parent=1 // pred_fallthru
      _
    // Predicated region
    $region34: #{tpu_custom_call.1} parent=1 // pred_check
      _
    $region35: #{tpu_custom_call.1} parent=1 // pred_check_branch
      %82 = sbr.rel (0) target = $region37
    $region36: #{tpu_custom_call.1} parent=1 // pred_region
      %83 = dma.done [#allocation9], 8192
    $region37: #{tpu_custom_call.1} parent=1 // pred_fallthru
      _
    // Predicated region
    $region38: #{tpu_custom_call.1} parent=1 // pred_check
      _
    $region39: #{tpu_custom_call.1} parent=1 // pred_check_branch
      %85 = sbr.rel (0) target = $region41
    $region40: #{tpu_custom_call.1} parent=1 // pred_region
      %86 = dma.done [#allocation9], 256
    $region41: #{tpu_custom_call.1} parent=1 // pred_fallthru
      _
    %v87 = vld [vmem:[#allocation10] ss:$8 sm:$0x3]
    %s88 = scalar_lea.vmem [#allocation10], 1
    %v89 = vld [vmem:[%s88] ss:$8 sm:$0x3]
    %s90 = scalar_lea.vmem [#allocation10], 2
    %v91 = vld [vmem:[%s90] ss:$8 sm:$0x3]
    %s92 = scalar_lea.vmem [#allocation10], 3
    %v93 = vld [vmem:[%s92] ss:$8 sm:$0x3]
    %v94 = vld [vmem:[#allocation10 + $0x4] ss:$0 sm:$0xff]
    %v95 = vld [vmem:[#allocation2] sm:$0xff]
    %v96 = vld [vmem:[#allocation5] sm:$0xff]
    %v97 = vld [vmem:[#allocation5 + $0x8] sm:$0xff]
    %v98 = vld [vmem:[#allocation5 + $0x10] sm:$0xff]
    %v99 = vld [vmem:[#allocation5 + $0x18] sm:$0xff]
    %v100 = vld [vmem:[#allocation5 + $0x20] sm:$0xff]
    %v101 = vld [vmem:[#allocation5 + $0x28] sm:$0xff]
    %v102 = vld [vmem:[#allocation5 + $0x30] sm:$0xf]
    %v103 = vld [vmem:[#allocation5 + $0x38] sm:$0xf]
    %v105 = vlaneseq
    %v106 = vshrl.u32 %v105, 7
    %v107 = vsub.s32 0, %v106
    %v108 = vrot.slane %v87, %v107
    %v109 = vlaneseq
    %v110 = vshrl.u32 %v109, 7
    %v111 = vsub.s32 1, %v110
    %v112 = vrot.slane %v87, %v111
    %vm115 = vcmask 228352
    %v117 = vsel %vm115, %v95, 0
    %vm119 = vcmask 1043456
    %v121 = vsel %vm119, %v102, 0
    %v124 = vsel %vm119, %v103, 0
    %126 = vmatprep.subr.mxu0 0.0
    %127 = vmatpush1.msra.mxu0 0.0
    %128 = vmatprep.subr.mxu0 0.0
    %129 = vmatpush1.msra.mxu0 0.0
    %130 = vmatprep.subr.mxu0 0.0
    %131 = vmatpush1.msra.mxu0 0.0
    %132 = vmatprep.subr.mxu0 0.0
    %133 = vmatpush1.msra.mxu0 0.0
    %134 = vmatprep.subr.mxu0 0.0
    %135 = vmatpush1.msra.mxu0 0.0
    %136 = vmatprep.subr.mxu0 0.0
    %137 = vmatpush1.msra.mxu0 0.0
    %138 = vmatprep.subr.mxu0 0.0
    %139 = vmatpush1.msra.mxu0 0.0
    %140 = vmatprep.subr.mxu0 0.0
    %141 = vmatpush1.msra.mxu0 0.0
    %142 = vmatprep.subr.mxu0 0.0
    %143 = vmatpush1.msra.mxu0 0.0
    %144 = vmatprep.subr.mxu0 0.0
    %145 = vmatpush1.msra.mxu0 0.0
    %146 = vmatprep.subr.mxu0 0.0
    %147 = vmatpush1.msra.mxu0 0.0
    %148 = vmatprep.subr.mxu0 0.0
    %149 = vmatpush1.msra.mxu0 0.0
    %150 = vmatprep.subr.mxu0 %v124
    %151 = vmatpush1.msra.mxu0 %v121
    %152 = vmatprep.subr.mxu0 %v101
    %153 = vmatpush1.msra.mxu0 %v100
    %154 = vmatprep.subr.mxu0 %v99
    %155 = vmatpush1.msra.mxu0 %v98
    %156 = vmatprep.subr.mxu0 %v97
    %157 = vmatpush1.msra.mxu0 %v96
    %158 = vmatprep.subr.mxu0 0.0
    %159 = vmatpush2.msra.mxu0 0.0
    %160 = vmatprep.subr.mxu0 0.0
    %161 = vmatpush2.msra.mxu0 0.0
    %162 = vmatprep.subr.mxu0 0.0
    %163 = vmatpush2.msra.mxu0 0.0
    %164 = vmatprep.subr.mxu0 0.0
    %165 = vmatpush2.msra.mxu0 0.0
    %166 = vmatprep.subr.mxu0 0.0
    %167 = vmatpush2.msra.mxu0 0.0
    %168 = vmatprep.subr.mxu0 0.0
    %169 = vmatpush2.msra.mxu0 0.0
    %170 = vmatprep.subr.mxu0 0.0
    %171 = vmatpush2.msra.mxu0 0.0
    %172 = vmatprep.subr.mxu0 0.0
    %173 = vmatpush2.msra.mxu0 0.0
    %174 = vmatprep.subr.mxu0 0.0
    %175 = vmatpush2.msra.mxu0 0.0
    %176 = vmatprep.subr.mxu0 0.0
    %177 = vmatpush2.msra.mxu0 0.0
    %178 = vmatprep.subr.mxu0 0.0
    %179 = vmatpush2.msra.mxu0 0.0
    %180 = vmatprep.subr.mxu0 0.0
    %181 = vmatpush2.msra.mxu0 0.0
    %182 = vmatprep.subr.mxu0 0.0
    %183 = vmatpush2.msra.mxu0 0.0
    %184 = vmatprep.subr.mxu0 0.0
    %185 = vmatpush2.msra.mxu0 0.0
    %186 = vmatprep.subr.mxu0 0.0
    %187 = vmatpush2.msra.mxu0 0.0
    %188 = vmatprep.subr.mxu0 0.0
    %189 = vmatpush2.msra.mxu0 0.0
    %190 = vmatprep.mubr.f32.mxu0 0.0
    %191 = vmatmul.mubr.f32.gmra.mxu0 %v117
    %v192 = vpop.f32.mrf.mxu0
    %v193 = vadd.f32 %v108, %v192
    %v194 = vpop.f32.mrf.mxu0
    %v195 = vadd.f32 %v112, %v194
    %196 = vdwg.mxu0
    %v197 = vmax.f32 %v193, 0.0
    %v198 = vmax.f32 %v195, 0.0
    %v199 = vld [vmem:[#allocation7] sm:$0xff]
    %v200 = vld [vmem:[#allocation7 + $0x8] sm:$0xff]
    %v201 = vld [vmem:[#allocation7 + $0x10] sm:$0xff]
    %v202 = vld [vmem:[#allocation7 + $0x18] sm:$0xff]
    %v203 = vld [vmem:[#allocation7 + $0x20] sm:$0xff]
    %v204 = vld [vmem:[#allocation7 + $0x28] sm:$0xff]
    %v205 = vld [vmem:[#allocation7 + $0x30] sm:$0xff]
    %v206 = vld [vmem:[#allocation7 + $0x38] sm:$0xff]
    %v207 = vld [vmem:[#allocation7 + $0x40] sm:$0xff]
    %v208 = vld [vmem:[#allocation7 + $0x48] sm:$0xff]
    %v209 = vld [vmem:[#allocation7 + $0x50] sm:$0xff]
    %v210 = vld [vmem:[#allocation7 + $0x58] sm:$0xff]
    %v211 = vld [vmem:[#allocation7 + $0x60] sm:$0xff]
    %v212 = vld [vmem:[#allocation7 + $0x68] sm:$0xff]
    %v213 = vld [vmem:[#allocation7 + $0x70] sm:$0xff]
    %v214 = vld [vmem:[#allocation7 + $0x78] sm:$0xff]
    %v215 = vld [vmem:[#allocation7 + $0x80] sm:$0xff]
    %v216 = vld [vmem:[#allocation7 + $0x88] sm:$0xff]
    %v217 = vld [vmem:[#allocation7 + $0x90] sm:$0xff]
    %v218 = vld [vmem:[#allocation7 + $0x98] sm:$0xff]
    %v219 = vld [vmem:[#allocation7 + $0xa0] sm:$0xff]
    %v220 = vld [vmem:[#allocation7 + $0xa8] sm:$0xff]
    %v221 = vld [vmem:[#allocation7 + $0xb0] sm:$0xff]
    %v222 = vld [vmem:[#allocation7 + $0xb8] sm:$0xff]
    %v223 = vld [vmem:[#allocation7 + $0xc0] sm:$0xff]
    %v224 = vld [vmem:[#allocation7 + $0xc8] sm:$0xff]
    %v225 = vld [vmem:[#allocation7 + $0xd0] sm:$0xff]
    %v226 = vld [vmem:[#allocation7 + $0xd8] sm:$0xff]
    %v227 = vld [vmem:[#allocation7 + $0xe0] sm:$0xff]
    %v228 = vld [vmem:[#allocation7 + $0xe8] sm:$0xff]
    %v229 = vld [vmem:[#allocation7 + $0xf0] sm:$0xff]
    %v230 = vld [vmem:[#allocation7 + $0xf8] sm:$0xff]
    %v231 = vld [vmem:[#allocation7 + $0x100] sm:$0xff]
    %v232 = vld [vmem:[#allocation7 + $0x108] sm:$0xff]
    %v233 = vld [vmem:[#allocation7 + $0x110] sm:$0xff]
    %v234 = vld [vmem:[#allocation7 + $0x118] sm:$0xff]
    %v235 = vld [vmem:[#allocation7 + $0x120] sm:$0xff]
    %v236 = vld [vmem:[#allocation7 + $0x128] sm:$0xff]
    %v237 = vld [vmem:[#allocation7 + $0x130] sm:$0xff]
    %v238 = vld [vmem:[#allocation7 + $0x138] sm:$0xff]
    %v239 = vld [vmem:[#allocation7 + $0x140] sm:$0xff]
    %v240 = vld [vmem:[#allocation7 + $0x148] sm:$0xff]
    %v241 = vld [vmem:[#allocation7 + $0x150] sm:$0xff]
    %v242 = vld [vmem:[#allocation7 + $0x158] sm:$0xff]
    %v243 = vld [vmem:[#allocation7 + $0x160] sm:$0xff]
    %v244 = vld [vmem:[#allocation7 + $0x168] sm:$0xff]
    %v245 = vld [vmem:[#allocation7 + $0x170] sm:$0xff]
    %v246 = vld [vmem:[#allocation7 + $0x178] sm:$0xff]
    %v247 = vld [vmem:[#allocation7 + $0x180] sm:$0xff]
    %v248 = vld [vmem:[#allocation7 + $0x188] sm:$0xff]
    %v249 = vld [vmem:[#allocation7 + $0x190] sm:$0xff]
    %v250 = vld [vmem:[#allocation7 + $0x198] sm:$0xff]
    %v251 = vld [vmem:[#allocation7 + $0x1a0] sm:$0xff]
    %v252 = vld [vmem:[#allocation7 + $0x1a8] sm:$0xff]
    %v253 = vld [vmem:[#allocation7 + $0x1b0] sm:$0xff]
    %v254 = vld [vmem:[#allocation7 + $0x1b8] sm:$0xff]
    %v255 = vld [vmem:[#allocation7 + $0x1c0] sm:$0xff]
    %v256 = vld [vmem:[#allocation7 + $0x1c8] sm:$0xff]
    %v257 = vld [vmem:[#allocation7 + $0x1d0] sm:$0xff]
    %v258 = vld [vmem:[#allocation7 + $0x1d8] sm:$0xff]
    %v259 = vld [vmem:[#allocation7 + $0x1e0] sm:$0xff]
    %v260 = vld [vmem:[#allocation7 + $0x1e8] sm:$0xff]
    %v261 = vld [vmem:[#allocation7 + $0x1f0] sm:$0xff]
    %v262 = vld [vmem:[#allocation7 + $0x1f8] sm:$0xff]
    %v264 = vlaneseq
    %v265 = vshrl.u32 %v264, 7
    %v266 = vsub.s32 0, %v265
    %v267 = vrot.slane %v89, %v266
    %v268 = vlaneseq
    %v269 = vshrl.u32 %v268, 7
    %v270 = vsub.s32 1, %v269
    %v271 = vrot.slane %v89, %v270
    %274 = vmatprep.subr.mxu0 %v230
    %275 = vmatpush1.msra.mxu0 %v229
    %276 = vmatprep.subr.mxu0 %v228
    %277 = vmatpush1.msra.mxu0 %v227
    %278 = vmatprep.subr.mxu0 %v226
    %279 = vmatpush1.msra.mxu0 %v225
    %280 = vmatprep.subr.mxu0 %v224
    %281 = vmatpush1.msra.mxu0 %v223
    %282 = vmatprep.subr.mxu0 %v222
    %283 = vmatpush1.msra.mxu0 %v221
    %284 = vmatprep.subr.mxu0 %v220
    %285 = vmatpush1.msra.mxu0 %v219
    %286 = vmatprep.subr.mxu0 %v218
    %287 = vmatpush1.msra.mxu0 %v217
    %288 = vmatprep.subr.mxu0 %v216
    %289 = vmatpush1.msra.mxu0 %v215
    %290 = vmatprep.subr.mxu0 %v214
    %291 = vmatpush1.msra.mxu0 %v213
    %292 = vmatprep.subr.mxu0 %v212
    %293 = vmatpush1.msra.mxu0 %v211
    %294 = vmatprep.subr.mxu0 %v210
    %295 = vmatpush1.msra.mxu0 %v209
    %296 = vmatprep.subr.mxu0 %v208
    %297 = vmatpush1.msra.mxu0 %v207
    %298 = vmatprep.subr.mxu0 %v206
    %299 = vmatpush1.msra.mxu0 %v205
    %300 = vmatprep.subr.mxu0 %v204
    %301 = vmatpush1.msra.mxu0 %v203
    %302 = vmatprep.subr.mxu0 %v202
    %303 = vmatpush1.msra.mxu0 %v201
    %304 = vmatprep.subr.mxu0 %v200
    %305 = vmatpush1.msra.mxu0 %v199
    %306 = vmatprep.subr.mxu0 %v262
    %307 = vmatpush2.msra.mxu0 %v261
    %308 = vmatprep.subr.mxu0 %v260
    %309 = vmatpush2.msra.mxu0 %v259
    %310 = vmatprep.subr.mxu0 %v258
    %311 = vmatpush2.msra.mxu0 %v257
    %312 = vmatprep.subr.mxu0 %v256
    %313 = vmatpush2.msra.mxu0 %v255
    %314 = vmatprep.subr.mxu0 %v254
    %315 = vmatpush2.msra.mxu0 %v253
    %316 = vmatprep.subr.mxu0 %v252
    %317 = vmatpush2.msra.mxu0 %v251
    %318 = vmatprep.subr.mxu0 %v250
    %319 = vmatpush2.msra.mxu0 %v249
    %320 = vmatprep.subr.mxu0 %v248
    %321 = vmatpush2.msra.mxu0 %v247
    %322 = vmatprep.subr.mxu0 %v246
    %323 = vmatpush2.msra.mxu0 %v245
    %324 = vmatprep.subr.mxu0 %v244
    %325 = vmatpush2.msra.mxu0 %v243
    %326 = vmatprep.subr.mxu0 %v242
    %327 = vmatpush2.msra.mxu0 %v241
    %328 = vmatprep.subr.mxu0 %v240
    %329 = vmatpush2.msra.mxu0 %v239
    %330 = vmatprep.subr.mxu0 %v238
    %331 = vmatpush2.msra.mxu0 %v237
    %332 = vmatprep.subr.mxu0 %v236
    %333 = vmatpush2.msra.mxu0 %v235
    %334 = vmatprep.subr.mxu0 %v234
    %335 = vmatpush2.msra.mxu0 %v233
    %336 = vmatprep.subr.mxu0 %v232
    %337 = vmatpush2.msra.mxu0 %v231
    %338 = vmatprep.mubr.f32.mxu0 %v198
    %339 = vmatmul.mubr.f32.gmra.mxu0 %v197
    %v340 = vpop.f32.mrf.mxu0
    %v341 = vadd.f32 %v267, %v340
    %v342 = vpop.f32.mrf.mxu0
    %v343 = vadd.f32 %v271, %v342
    %344 = vdwg.mxu0
    %v345 = vmax.f32 %v341, 0.0
    %v346 = vmax.f32 %v343, 0.0
    %v347 = vld [vmem:[#allocation8] sm:$0xff]
    %v348 = vld [vmem:[#allocation8 + $0x8] sm:$0xff]
    %v349 = vld [vmem:[#allocation8 + $0x10] sm:$0xff]
    %v350 = vld [vmem:[#allocation8 + $0x18] sm:$0xff]
    %v351 = vld [vmem:[#allocation8 + $0x20] sm:$0xff]
    %v352 = vld [vmem:[#allocation8 + $0x28] sm:$0xff]
    %v353 = vld [vmem:[#allocation8 + $0x30] sm:$0xff]
    %v354 = vld [vmem:[#allocation8 + $0x38] sm:$0xff]
    %v355 = vld [vmem:[#allocation8 + $0x40] sm:$0xff]
    %v356 = vld [vmem:[#allocation8 + $0x48] sm:$0xff]
    %v357 = vld [vmem:[#allocation8 + $0x50] sm:$0xff]
    %v358 = vld [vmem:[#allocation8 + $0x58] sm:$0xff]
    %v359 = vld [vmem:[#allocation8 + $0x60] sm:$0xff]
    %v360 = vld [vmem:[#allocation8 + $0x68] sm:$0xff]
    %v361 = vld [vmem:[#allocation8 + $0x70] sm:$0xff]
    %v362 = vld [vmem:[#allocation8 + $0x78] sm:$0xff]
    %v363 = vld [vmem:[#allocation8 + $0x80] sm:$0xff]
    %v364 = vld [vmem:[#allocation8 + $0x88] sm:$0xff]
    %v365 = vld [vmem:[#allocation8 + $0x90] sm:$0xff]
    %v366 = vld [vmem:[#allocation8 + $0x98] sm:$0xff]
    %v367 = vld [vmem:[#allocation8 + $0xa0] sm:$0xff]
    %v368 = vld [vmem:[#allocation8 + $0xa8] sm:$0xff]
    %v369 = vld [vmem:[#allocation8 + $0xb0] sm:$0xff]
    %v370 = vld [vmem:[#allocation8 + $0xb8] sm:$0xff]
    %v371 = vld [vmem:[#allocation8 + $0xc0] sm:$0xff]
    %v372 = vld [vmem:[#allocation8 + $0xc8] sm:$0xff]
    %v373 = vld [vmem:[#allocation8 + $0xd0] sm:$0xff]
    %v374 = vld [vmem:[#allocation8 + $0xd8] sm:$0xff]
    %v375 = vld [vmem:[#allocation8 + $0xe0] sm:$0xff]
    %v376 = vld [vmem:[#allocation8 + $0xe8] sm:$0xff]
    %v377 = vld [vmem:[#allocation8 + $0xf0] sm:$0xff]
    %v378 = vld [vmem:[#allocation8 + $0xf8] sm:$0xff]
    %v379 = vld [vmem:[#allocation8 + $0x100] sm:$0xff]
    %v380 = vld [vmem:[#allocation8 + $0x108] sm:$0xff]
    %v381 = vld [vmem:[#allocation8 + $0x110] sm:$0xff]
    %v382 = vld [vmem:[#allocation8 + $0x118] sm:$0xff]
    %v383 = vld [vmem:[#allocation8 + $0x120] sm:$0xff]
    %v384 = vld [vmem:[#allocation8 + $0x128] sm:$0xff]
    %v385 = vld [vmem:[#allocation8 + $0x130] sm:$0xff]
    %v386 = vld [vmem:[#allocation8 + $0x138] sm:$0xff]
    %v387 = vld [vmem:[#allocation8 + $0x140] sm:$0xff]
    %v388 = vld [vmem:[#allocation8 + $0x148] sm:$0xff]
    %v389 = vld [vmem:[#allocation8 + $0x150] sm:$0xff]
    %v390 = vld [vmem:[#allocation8 + $0x158] sm:$0xff]
    %v391 = vld [vmem:[#allocation8 + $0x160] sm:$0xff]
    %v392 = vld [vmem:[#allocation8 + $0x168] sm:$0xff]
    %v393 = vld [vmem:[#allocation8 + $0x170] sm:$0xff]
    %v394 = vld [vmem:[#allocation8 + $0x178] sm:$0xff]
    %v395 = vld [vmem:[#allocation8 + $0x180] sm:$0xff]
    %v396 = vld [vmem:[#allocation8 + $0x188] sm:$0xff]
    %v397 = vld [vmem:[#allocation8 + $0x190] sm:$0xff]
    %v398 = vld [vmem:[#allocation8 + $0x198] sm:$0xff]
    %v399 = vld [vmem:[#allocation8 + $0x1a0] sm:$0xff]
    %v400 = vld [vmem:[#allocation8 + $0x1a8] sm:$0xff]
    %v401 = vld [vmem:[#allocation8 + $0x1b0] sm:$0xff]
    %v402 = vld [vmem:[#allocation8 + $0x1b8] sm:$0xff]
    %v403 = vld [vmem:[#allocation8 + $0x1c0] sm:$0xff]
    %v404 = vld [vmem:[#allocation8 + $0x1c8] sm:$0xff]
    %v405 = vld [vmem:[#allocation8 + $0x1d0] sm:$0xff]
    %v406 = vld [vmem:[#allocation8 + $0x1d8] sm:$0xff]
    %v407 = vld [vmem:[#allocation8 + $0x1e0] sm:$0xff]
    %v408 = vld [vmem:[#allocation8 + $0x1e8] sm:$0xff]
    %v409 = vld [vmem:[#allocation8 + $0x1f0] sm:$0xff]
    %v410 = vld [vmem:[#allocation8 + $0x1f8] sm:$0xff]
    %v412 = vlaneseq
    %v413 = vshrl.u32 %v412, 7
    %v414 = vsub.s32 0, %v413
    %v415 = vrot.slane %v91, %v414
    %v416 = vlaneseq
    %v417 = vshrl.u32 %v416, 7
    %v418 = vsub.s32 1, %v417
    %v419 = vrot.slane %v91, %v418
    %422 = vmatprep.subr.mxu0 %v378
    %423 = vmatpush1.msra.mxu0 %v377
    %424 = vmatprep.subr.mxu0 %v376
    %425 = vmatpush1.msra.mxu0 %v375
    %426 = vmatprep.subr.mxu0 %v374
    %427 = vmatpush1.msra.mxu0 %v373
    %428 = vmatprep.subr.mxu0 %v372
    %429 = vmatpush1.msra.mxu0 %v371
    %430 = vmatprep.subr.mxu0 %v370
    %431 = vmatpush1.msra.mxu0 %v369
    %432 = vmatprep.subr.mxu0 %v368
    %433 = vmatpush1.msra.mxu0 %v367
    %434 = vmatprep.subr.mxu0 %v366
    %435 = vmatpush1.msra.mxu0 %v365
    %436 = vmatprep.subr.mxu0 %v364
    %437 = vmatpush1.msra.mxu0 %v363
    %438 = vmatprep.subr.mxu0 %v362
    %439 = vmatpush1.msra.mxu0 %v361
    %440 = vmatprep.subr.mxu0 %v360
    %441 = vmatpush1.msra.mxu0 %v359
    %442 = vmatprep.subr.mxu0 %v358
    %443 = vmatpush1.msra.mxu0 %v357
    %444 = vmatprep.subr.mxu0 %v356
    %445 = vmatpush1.msra.mxu0 %v355
    %446 = vmatprep.subr.mxu0 %v354
    %447 = vmatpush1.msra.mxu0 %v353
    %448 = vmatprep.subr.mxu0 %v352
    %449 = vmatpush1.msra.mxu0 %v351
    %450 = vmatprep.subr.mxu0 %v350
    %451 = vmatpush1.msra.mxu0 %v349
    %452 = vmatprep.subr.mxu0 %v348
    %453 = vmatpush1.msra.mxu0 %v347
    %454 = vmatprep.subr.mxu0 %v410
    %455 = vmatpush2.msra.mxu0 %v409
    %456 = vmatprep.subr.mxu0 %v408
    %457 = vmatpush2.msra.mxu0 %v407
    %458 = vmatprep.subr.mxu0 %v406
    %459 = vmatpush2.msra.mxu0 %v405
    %460 = vmatprep.subr.mxu0 %v404
    %461 = vmatpush2.msra.mxu0 %v403
    %462 = vmatprep.subr.mxu0 %v402
    %463 = vmatpush2.msra.mxu0 %v401
    %464 = vmatprep.subr.mxu0 %v400
    %465 = vmatpush2.msra.mxu0 %v399
    %466 = vmatprep.subr.mxu0 %v398
    %467 = vmatpush2.msra.mxu0 %v397
    %468 = vmatprep.subr.mxu0 %v396
    %469 = vmatpush2.msra.mxu0 %v395
    %470 = vmatprep.subr.mxu0 %v394
    %471 = vmatpush2.msra.mxu0 %v393
    %472 = vmatprep.subr.mxu0 %v392
    %473 = vmatpush2.msra.mxu0 %v391
    %474 = vmatprep.subr.mxu0 %v390
    %475 = vmatpush2.msra.mxu0 %v389
    %476 = vmatprep.subr.mxu0 %v388
    %477 = vmatpush2.msra.mxu0 %v387
    %478 = vmatprep.subr.mxu0 %v386
    %479 = vmatpush2.msra.mxu0 %v385
    %480 = vmatprep.subr.mxu0 %v384
    %481 = vmatpush2.msra.mxu0 %v383
    %482 = vmatprep.subr.mxu0 %v382
    %483 = vmatpush2.msra.mxu0 %v381
    %484 = vmatprep.subr.mxu0 %v380
    %485 = vmatpush2.msra.mxu0 %v379
    %486 = vmatprep.mubr.f32.mxu0 %v346
    %487 = vmatmul.mubr.f32.gmra.mxu0 %v345
    %v488 = vpop.f32.mrf.mxu0
    %v489 = vadd.f32 %v415, %v488
    %v490 = vpop.f32.mrf.mxu0
    %v491 = vadd.f32 %v419, %v490
    %492 = vdwg.mxu0
    %493 = vst [vmem:[#allocation11] sm:$0xff] %v489
    %494 = vst [vmem:[#allocation11 + $0x8] sm:$0xff] %v491
    %v495 = vmax.f32 %v489, 0.0
    %v496 = vmax.f32 %v491, 0.0
    %v498 = vlaneseq
    %v499 = vshrl.u32 %v498, 7
    %v500 = vsub.s32 0, %v499
    %v501 = vrot.slane %v93, %v500
    %v502 = vlaneseq
    %v503 = vshrl.u32 %v502, 7
    %v504 = vsub.s32 1, %v503
    %v505 = vrot.slane %v93, %v504
    %v508 = vmul.f32 %v495, %v501
    %v509 = vmul.f32 %v496, %v505
    %v510 = vadd.f32 %v508, %v509
    %511 = vadd.xlane.f32.xlu0 %v510
    %v512 = vpop.xlane.xlu0 %511
    %v513 = vadd.f32 %v512, %v94
    %vm514 = vcmask 7168
    %515 = vst.msk [vmem:[%s5] sm:$0xff] %vm514, %v513
    // Predicated region
    $region42: #{tpu_custom_call.1} parent=1 // pred_check
      _
    $region43: #{tpu_custom_call.1} parent=1 // pred_check_branch
      %517 = sbr.rel (0) target = $region45
    $region44: #{tpu_custom_call.1} parent=1 // pred_region
      _
    $region45: #{tpu_custom_call.1} parent=1 // pred_fallthru
      _
    // Predicated region
    $region46: #{tpu_custom_call.1} parent=1 // pred_check
      _
    $region47: #{tpu_custom_call.1} parent=1 // pred_check_branch
      %519 = sbr.rel (0) target = $region49
    $region48: #{tpu_custom_call.1} parent=1 // pred_region
      %s521 = ssub.s32 256, 256
      %522 = vsyncadd [#allocation4], %s521
      %s524 = sshll.u32 [#allocation11], 4
      %s525 = int_to_ptr.vmem [resolvable:$true] %s524
      %527 = dma.vmem_to_hbm [thread:$0]  %s525, 256, %s6, [#allocation4]
    $region49: #{tpu_custom_call.1} parent=1 // pred_fallthru
      _
    // Predicated region
    $region50: #{tpu_custom_call.1} parent=1 // pred_check
      _
    $region51: #{tpu_custom_call.1} parent=1 // pred_check_branch
      %529 = sbr.rel (0) target = $region53
    $region52: #{tpu_custom_call.1} parent=1 // pred_region
      _
    $region53: #{tpu_custom_call.1} parent=1 // pred_fallthru
      _
    // Predicated region
    $region54: #{tpu_custom_call.1} parent=1 // pred_check
      _
    $region55: #{tpu_custom_call.1} parent=1 // pred_check_branch
      %531 = sbr.rel (0) target = $region57
    $region56: #{tpu_custom_call.1} parent=1 // pred_region
      %532 = dma.done [#allocation4], 256
    $region57: #{tpu_custom_call.1} parent=1 // pred_fallthru
      _
    %533 = vsyncpa [#allocation3], 1
    %534 = vsyncpa [#allocation6], 1
    %535 = vsyncpa [#allocation9], 1
    %536 = vsyncpa [#allocation4], 1

</llo_original>
